<compile_context>
chip_gen: v5e
topology: v5e:2x2
jax: 0.10.0
libtpu: 0.0.40
codegen_flags: <defaults>
</compile_context>

<pallas_src>
import functools

import jax
import jax.numpy as jnp
import numpy as np
from jax.experimental import pallas as pl
from jax.experimental.pallas import tpu as pltpu

_LANE = 128  # TPU lane width


def _ctc_greedy_kernel(emission_ref, out_ref, carry_ref, *, blank):
    t = pl.program_id(0)
    tile_t, num_label = emission_ref.shape
    n_chunks = tile_t // _LANE

    @pl.when(t == 0)
    def _init():
        # sentinel "previous label" that can never match a real label index
        carry_ref[...] = jnp.full((1, 1), -1, jnp.int32)

    # loop-invariant iotas (hoisted out of the chunk loop)
    lbl_ids = jax.lax.broadcasted_iota(jnp.int32, (_LANE, num_label), 1)
    sub_ids = jax.lax.broadcasted_iota(jnp.int32, (_LANE, _LANE), 0)
    lane_sq = jax.lax.broadcasted_iota(jnp.int32, (_LANE, _LANE), 1)
    lane_row = jax.lax.broadcasted_iota(jnp.int32, (1, _LANE), 1)

    prev_last = carry_ref[...]  # (1, 1) int32: argmax of the previous frame

    for c in range(n_chunks):  # static unroll over 128-row chunks of the tile
        e = emission_ref[pl.ds(c * _LANE, _LANE), :].astype(jnp.float32)  # (128, L)

        # --- argmax over labels (lane axis), first occurrence on ties ---
        maxv = jnp.max(e, axis=-1, keepdims=True)                          # (128, 1)
        idx_col = jnp.min(jnp.where(e == maxv, lbl_ids, num_label),
                          axis=-1, keepdims=True).astype(jnp.int32)        # (128, 1)

        # --- column -> lane-dense row (1, 128) without a vector transpose:
        #     broadcast along lanes, keep the diagonal, reduce over sublanes ---
        idx_row = jnp.max(
            jnp.where(sub_ids == lane_sq,
                      jnp.broadcast_to(idx_col, (_LANE, _LANE)), -1),
            axis=0, keepdims=True)                                         # (1, 128)

        # --- unique_consecutive run-start test (carried across chunks/tiles) ---
        prev_row = pltpu.roll(idx_row, shift=1, axis=1)                    # (1, 128)
        prev_row = jnp.where(lane_row == 0,
                             jnp.broadcast_to(prev_last, (1, _LANE)), prev_row)
        keep = jnp.logical_and(idx_row != blank, idx_row != prev_row)

        out_ref[:, pl.ds(c * _LANE, _LANE)] = jnp.where(keep, idx_row, -1)

        # this chunk's last argmax becomes the next chunk's "previous frame"
        prev_last = jnp.max(jnp.where(lane_row == _LANE - 1, idx_row, -1),
                            axis=1, keepdims=True)                         # (1, 1)

    carry_ref[...] = prev_last  # carry into the next grid step (next time tile)


def _pick_tile_t(num_seq, num_label, itemsize, vmem_budget_bytes=8 << 20):
    """Largest multiple-of-128 row tile whose double-buffered input fits the
    budget, capped at 512 rows (~HBM-roofline-saturating tile size) and at the
    128-padded sequence length. The 8 MiB default budget fits v5e's 16 MiB
    scoped default and v7x's 64 MiB physical VMEM with headroom."""
    rows_budget = vmem_budget_bytes // max(1, 2 * num_label * itemsize)
    rows = max(_LANE, (rows_budget // _LANE) * _LANE)
    rows = min(rows, 4 * _LANE)
    padded_seq = ((num_seq + _LANE - 1) // _LANE) * _LANE
    return int(min(rows, padded_seq))


def greedy_ctc_core(emission: jax.Array, *, blank: int = 0, tile_t: int | None = None):
    """TPU hot path. Returns an int32 array of shape (num_seq,): the argmax label
    for frames that survive CTC collapse (unique_consecutive + blank removal),
    and -1 for dropped frames."""
    num_seq, num_label = emission.shape
    itemsize = emission.dtype.itemsize
    if tile_t is None:
        tile_t = _pick_tile_t(num_seq, num_label, itemsize)
    assert tile_t % _LANE == 0, "tile_t must be a multiple of 128 (lane width)"

    padded_t = ((num_seq + tile_t - 1) // tile_t) * tile_t
    if padded_t != num_seq:
        # pad rows come after all real frames, so they cannot affect real keeps;
        # their outputs are sliced away below.
        emission = jnp.pad(emission, ((0, padded_t - num_seq), (0, 0)))
    num_tiles = padded_t // tile_t

    # explicit VMEM limit: 2x double-buffered input tile + output blocks +
    # the (128,128) conversion intermediate, with generous headroom.
    vmem_need = (2 * tile_t * num_label * itemsize + 2 * tile_t * 4
                 + 4 * _LANE * _LANE + 4096)
    vmem_limit = int(min(32 << 20, max(4 << 20, 4 * vmem_need)))

    out = pl.pallas_call(
        functools.partial(_ctc_greedy_kernel, blank=blank),
        out_shape=jax.ShapeDtypeStruct((1, padded_t), jnp.int32),
        grid_spec=pltpu.PrefetchScalarGridSpec(
            num_scalar_prefetch=0,
            grid=(num_tiles,),
            in_specs=[pl.BlockSpec((tile_t, num_label), lambda i: (i, 0))],
            out_specs=pl.BlockSpec((1, tile_t), lambda i: (0, i)),
            scratch_shapes=[pltpu.VMEM((1, 1), jnp.int32)],
        ),
        compiler_params=pltpu.CompilerParams(
            # the (1,1) carried argmax makes the time axis a sequential dependence
            dimension_semantics=("arbitrary",),
            vmem_limit_bytes=vmem_limit,
        ),
    )(emission)
    return out[0, :num_seq]


def greedy_ctc_decode(emission: jax.Array, labels, *, blank: int = 0,
                      tile_t: int | None = None):
    """Full GreedyCTCDecoder.forward semantics: returns the list of words."""
    kept = greedy_ctc_core(emission, blank=blank, tile_t=tile_t)
    kept = np.asarray(jax.block_until_ready(kept))
    kept = kept[kept >= 0]
    # TODO(synk): string join / dictionary lookup has no TPU equivalent; host-side.
    joined = ''.join(labels[int(i)] for i in kept)
    return joined.replace('|', ' ').strip().split()


def _ref_collapse_np(emission_np, blank=0):
    idx = np.argmax(emission_np, axis=-1)
    uniq = [idx[0]] + [idx[t] for t in range(1, len(idx)) if idx[t] != idx[t - 1]]
    return [int(i) for i in uniq if i != blank]


if __name__ == "__main__":
    # 32 labels: index 0 is blank '-', index 1 is the word separator '|'.
    alphabet = "-|abcdefghijklmnopqrstuvwxyz'.?!"
    labels = {i: c for i, c in enumerate(alphabet)}
    num_label = len(alphabet)          # 32
    num_seq = 250                      # non-multiple of 128 -> exercises padding
    tile_t = 128                       # 2 time tiles -> exercises the cross-tile carry

    key = jax.random.PRNGKey(0)
    emission = jax.random.normal(key, (num_seq, num_label), dtype=jnp.float32)

    # run the Pallas hot path once and block on it
    kept_dev = greedy_ctc_core(emission, tile_t=tile_t)
    jax.block_until_ready(kept_dev)

    test_cases = [np.asarray(emission)]

    # crafted case: all-negative logits (verifies padded lanes 32..127 are masked
    # out of the lane reductions) with runs spanning the 128-row tile boundary,
    # blanks and a word separator.
    targets = np.zeros((256,), dtype=np.int64)
    targets[0:3] = 4            # run inside tile 0
    targets[3] = 0              # blank
    targets[4:10] = 9
    targets[120:136] = 5        # run spanning the tile-0 / tile-1 boundary
    targets[136:140] = 1        # word separator '|'
    targets[140:150] = 7
    crafted = np.full((256, num_label), -2.0, dtype=np.float32)
    crafted[np.arange(256), targets] = -0.5
    test_cases.append(crafted)

    for em_np in test_cases:
        kept = greedy_ctc_core(jnp.asarray(em_np), tile_t=tile_t)
        kept = np.asarray(jax.block_until_ready(kept))
        got = [int(i) for i in kept[kept >= 0]]
        want = _ref_collapse_np(em_np, blank=0)
        assert got == want, (got, want)

        got_tr = greedy_ctc_decode(jnp.asarray(em_np), labels, tile_t=tile_t)
        want_tr = ''.join(labels[i] for i in want).replace('|', ' ').strip().split()
        assert got_tr == want_tr, (got_tr, want_tr)

    print("KERNEL_OK")
</pallas_src>

<mosaic_0001>
module attributes {stable_mosaic.version = 11 : i64} {
  func.func @_ctc_greedy_kernel(%arg0: i32, %arg1: memref<128x32xf32, #tpu.memory_space<vmem>>, %arg2: memref<1x128xi32, #tpu.memory_space<vmem>>, %arg3: memref<1x1xi32, #tpu.memory_space<vmem>>) attributes {dimension_semantics = [#tpu.dimension_semantics<arbitrary>], iteration_bounds = array<i64: 2>, scalar_prefetch = 0 : i64, scratch_operands = 1 : i64, tpu.core_type = #tpu.core_type<tc>, window_params = [{transform_indices = @transform_0, window_bounds = array<i64: 128, 32>}, {transform_indices = @transform_1, window_bounds = array<i64: 1, 128>}]} {
    %c0_i32 = arith.constant 0 : i32
    %0 = arith.cmpi eq, %arg0, %c0_i32 : i32
    %1 = arith.extui %0 : i1 to i32
    %c0_i32_0 = arith.constant 0 : i32
    %2 = arith.cmpi ne, %1, %c0_i32_0 : i32
    scf.if %2 {
      %c-1_i32_15 = arith.constant -1 : i32
      %44 = vector.broadcast %c-1_i32_15 : i32 to vector<1x1xi32>
      %c0_16 = arith.constant 0 : index
      %c0_17 = arith.constant 0 : index
      %45 = vector.load %arg3[%c0_16, %c0_17] : memref<1x1xi32, #tpu.memory_space<vmem>>, vector<1x1xi32>
      tpu.vector_store %arg3[%c0_16, %c0_17], %44 {strides = array<i32>} : memref<1x1xi32, #tpu.memory_space<vmem>>, vector<1x1xi32>,
    } else {
    }
    %3 = tpu.iota {dimensions = array<i32: 1>} : vector<128x32xi32>
    %4 = tpu.iota {dimensions = array<i32: 0>} : vector<128x128xi32>
    %5 = tpu.iota {dimensions = array<i32: 1>} : vector<128x128xi32>
    %6 = tpu.iota {dimensions = array<i32: 1>} : vector<1x128xi32>
    %c0 = arith.constant 0 : index
    %c0_1 = arith.constant 0 : index
    %7 = vector.load %arg3[%c0, %c0_1] : memref<1x1xi32, #tpu.memory_space<vmem>>, vector<1x1xi32>
    %c0_2 = arith.constant 0 : index
    %c0_3 = arith.constant 0 : index
    %8 = vector.load %arg1[%c0_2, %c0_3] : memref<128x32xf32, #tpu.memory_space<vmem>>, vector<128x32xf32>
    %cst = arith.constant dense<0xFF800000> : vector<128xf32>
    %9 = vector.multi_reduction <maximumf>, %8, %cst [1] : vector<128x32xf32> to vector<128xf32>
    %10 = vector.shape_cast %9 : vector<128xf32> to vector<128x1xf32>
    %11 = vector.broadcast %10 : vector<128x1xf32> to vector<128x32xf32>
    %12 = arith.cmpf oeq, %8, %11 : vector<128x32xf32>
    %c32_i32 = arith.constant 32 : i32
    %13 = vector.broadcast %c32_i32 : i32 to vector<128x32xi32>
    %14 = arith.select %12, %3, %13 : vector<128x32xi1>, vector<128x32xi32>
    %cst_4 = arith.constant dense<2147483647> : vector<128xi32>
    %15 = vector.multi_reduction <minsi>, %14, %cst_4 [1] : vector<128x32xi32> to vector<128xi32>
    %16 = vector.shape_cast %15 : vector<128xi32> to vector<128x1xi32>
    %17 = arith.cmpi eq, %4, %5 : vector<128x128xi32>
    %18 = vector.shape_cast %16 : vector<128x1xi32> to vector<128x1xi32>
    %19 = vector.broadcast %18 : vector<128x1xi32> to vector<128x128xi32>
    %c-1_i32 = arith.constant -1 : i32
    %20 = vector.broadcast %c-1_i32 : i32 to vector<128x128xi32>
    %21 = arith.select %17, %19, %20 : vector<128x128xi1>, vector<128x128xi32>
    %cst_5 = arith.constant dense<-2147483648> : vector<128xi32>
    %22 = vector.multi_reduction <maxsi>, %21, %cst_5 [0] : vector<128x128xi32> to vector<128xi32>
    %23 = vector.shape_cast %22 : vector<128xi32> to vector<1x128xi32>
    %c1_i32 = arith.constant 1 : i32
    %24 = tpu.dynamic_rotate %23 by %c1_i32 dim 1 : vector<1x128xi32>, i32 -> vector<1x128xi32>
    %c0_i32_6 = arith.constant 0 : i32
    %25 = vector.broadcast %c0_i32_6 : i32 to vector<1x128xi32>
    %26 = arith.cmpi eq, %6, %25 : vector<1x128xi32>
    %27 = vector.shape_cast %7 : vector<1x1xi32> to vector<1x1xi32>
    %28 = vector.broadcast %27 : vector<1x1xi32> to vector<1x128xi32>
    %29 = arith.select %26, %28, %24 : vector<1x128xi1>, vector<1x128xi32>
    %c0_i32_7 = arith.constant 0 : i32
    %30 = vector.broadcast %c0_i32_7 : i32 to vector<1x128xi32>
    %31 = arith.cmpi ne, %23, %30 : vector<1x128xi32>
    %32 = arith.cmpi ne, %23, %29 : vector<1x128xi32>
    %33 = arith.andi %31, %32 : vector<1x128xi1>
    %c-1_i32_8 = arith.constant -1 : i32
    %34 = vector.broadcast %c-1_i32_8 : i32 to vector<1x128xi32>
    %35 = arith.select %33, %23, %34 : vector<1x128xi1>, vector<1x128xi32>
    %c0_9 = arith.constant 0 : index
    %c0_10 = arith.constant 0 : index
    %36 = vector.load %arg2[%c0_9, %c0_10] : memref<1x128xi32, #tpu.memory_space<vmem>>, vector<1x128xi32>
    tpu.vector_store %arg2[%c0_9, %c0_10], %35 {strides = array<i32>} : memref<1x128xi32, #tpu.memory_space<vmem>>, vector<1x128xi32>,
    %c127_i32 = arith.constant 127 : i32
    %37 = vector.broadcast %c127_i32 : i32 to vector<1x128xi32>
    %38 = arith.cmpi eq, %6, %37 : vector<1x128xi32>
    %c-1_i32_11 = arith.constant -1 : i32
    %39 = vector.broadcast %c-1_i32_11 : i32 to vector<1x128xi32>
    %40 = arith.select %38, %23, %39 : vector<1x128xi1>, vector<1x128xi32>
    %cst_12 = arith.constant dense<-2147483648> : vector<1xi32>
    %41 = vector.multi_reduction <maxsi>, %40, %cst_12 [1] : vector<1x128xi32> to vector<1xi32>
    %42 = vector.shape_cast %41 : vector<1xi32> to vector<1x1xi32>
    %c0_13 = arith.constant 0 : index
    %c0_14 = arith.constant 0 : index
    %43 = vector.load %arg3[%c0_13, %c0_14] : memref<1x1xi32, #tpu.memory_space<vmem>>, vector<1x1xi32>
    tpu.vector_store %arg3[%c0_13, %c0_14], %42 {strides = array<i32>} : memref<1x1xi32, #tpu.memory_space<vmem>>, vector<1x1xi32>,
    return
  }
  func.func @transform_0(%arg0: i32) -> (i32, i32) {
    %c0_i32 = arith.constant 0 : i32
    %c0_i32_0 = arith.constant 0 : i32
    return %arg0, %c0_i32 : i32, i32
  }
  func.func @transform_1(%arg0: i32) -> (i32, i32) {
    %c0_i32 = arith.constant 0 : i32
    %c0_i32_0 = arith.constant 0 : i32
    return %c0_i32, %arg0 : i32, i32
  }
}

</mosaic_0001>

<llo_original>
// kernel: tpu_custom_call.1
$region0: #{tpu_custom_call.1}
  #allocation0 [shape = 'u32[]', space=smem, size = 0x4, offset = 0x4, fixed_abs, tag = 'smem constant byte address 0x4 - core index']
  #allocation1 [shape = 'u32[72,128]{1,0:T(1,128)}', space=vmem, size = 0x9000, scoped, tag = 'internal scratch']
  #allocation2 [shape = 's32[1,1]{1,0:T(1,128)}', space=vmem, size = 0x200, scoped, tag = 'scratch operand']
  %s0 = inlined_call_operand.vmem [shape: f32[256,32], index: 0, kind: input, shape index: {}]
  %s1 = inlined_call_operand.hbm [shape: s32[1,256], index: 1, kind: output, shape index: {}]
  %s2 = sld [smem:[#allocation0]]
  $region41: #{tpu_custom_call.1} parent=0
    _
  %s4 = ssub.s32 1, %s2
  %s5 = scalar_select 0, %s4, %s2
  $region1: #{tpu_custom_call.1} parent=0
    #allocation3 [shape = 'u8[1024]{0}', space=vmem, size = 0x400, scoped, tag = 'output window, operand 0']
    #allocation4 [shape = 's32[2]{0}', space=sflag, size = 0x8, scoped, tag = 'scoped memory for tpu_custom_call.1']
    %6 = vsyncpa [#allocation4], 0
    %s7 = scalar_lea.sflag [#allocation4], 1
    %8 = vsyncpa %s7, 0
    loop: start=0, step=1, limit=4
    $region2: #{tpu_custom_call.1} parent=1 // loop_pre_header
      _
    $region3: #{tpu_custom_call.1} parent=1 // loop_header
      %s10 = sphi 0, %s14
      %p11 = scmp.ge.s32.totalorder %s10, 4
      %s20 = sphi 0, %s22
      %s23 = sphi 0, %s20
      %s24 = sphi 0, %s23
      %s40 = sphi 0, %s24
      %s46 = sphi 0, %s48
      %s49 = sphi 0, %s46
      %s50 = sphi 0, %s49
      %s66 = sphi 0, %s50
    $region4: #{tpu_custom_call.1} parent=1 // loop_header_branch
      %13 = sbr.rel (%p11) target = $region8
    $region5: #{tpu_custom_call.1} parent=1 // loop_body
      %s15 = ssub.s32 %s10, 1
      %s16 = ssub.s32 %s10, 2
      %s17 = sadd.s32 %s10, 1
      %s18 = ssub.s32 %s10, %s17
      %p19 = scmp.eq.s32.totalorder %s18, 0
      %s21 = sadd.s32 %s20, 1
      %s22 = scalar_select %p19, %s20, %s21
      %p25 = pneg %p19
      %p26 = scmp.eq.s32.totalorder %s10, 1
      %p27 = por %p25, %p26
      %p28 = scmp.ne.s32.totalorder %s20, %s23
      %p29 = scmp.eq.s32.totalorder %s10, 0
      %p30 = por %p28, %p29
      %p31 = scmp.ne.s32.totalorder %s20, %s23
      %p32 = scmp.eq.s32.totalorder %s15, 1
      %p33 = por %p31, %p32
      %p34 = scmp.ne.s32.totalorder %s23, %s24
      %p35 = scmp.eq.s32.totalorder %s15, 0
      %p36 = por %p34, %p35
      %p37 = scmp.ne.s32.totalorder %s23, %s24
      %p38 = scmp.eq.s32.totalorder %s16, 1
      %p39 = por %p37, %p38
      %p41 = scmp.ne.s32.totalorder %s24, %s40
      %p42 = scmp.eq.s32.totalorder %s16, 0
      %p43 = por %p41, %p42
      %s44 = ssub.s32 %s10, %s17
      %p45 = scmp.eq.s32.totalorder %s44, 0
      %s47 = sadd.s32 %s46, 1
      %s48 = scalar_select %p45, %s46, %s47
      %p51 = pneg %p45
      %p52 = scmp.eq.s32.totalorder %s10, 1
      %p53 = por %p51, %p52
      %p54 = scmp.ne.s32.totalorder %s46, %s49
      %p55 = scmp.eq.s32.totalorder %s10, 0
      %p56 = por %p54, %p55
      %p57 = scmp.ne.s32.totalorder %s46, %s49
      %p58 = scmp.eq.s32.totalorder %s15, 1
      %p59 = por %p57, %p58
      %p60 = scmp.ne.s32.totalorder %s49, %s50
      %p61 = scmp.eq.s32.totalorder %s15, 0
      %p62 = por %p60, %p61
      %p63 = scmp.ne.s32.totalorder %s49, %s50
      %p64 = scmp.eq.s32.totalorder %s16, 1
      %p65 = por %p63, %p64
      %p67 = scmp.ne.s32.totalorder %s50, %s66
      %p68 = scmp.eq.s32.totalorder %s16, 0
      %p69 = por %p67, %p68
      %p70 = scmp.le.s32.totalorder 1, %s10
      %p71 = scmp.lt.s32.totalorder %s10, 3
      %p72 = pnand %p70, %p71
      %p73 = pneg %p72
      // Predicated region
      $region9: #{tpu_custom_call.1} parent=5 // pred_check
        _
      $region10: #{tpu_custom_call.1} parent=5 // pred_check_branch
        %75 = sbr.rel (%p72) target = $region12
      $region11: #{tpu_custom_call.1} parent=5 // pred_region
        %s76 = ssub.s32 %s10, 1
      $region12: #{tpu_custom_call.1} parent=5 // pred_fallthru
        _
      %p77 = scmp.lt.s32.totalorder %s10, 2
      // Predicated region
      $region13: #{tpu_custom_call.1} parent=5 // pred_check
        %p78 = pneg %p77
      $region14: #{tpu_custom_call.1} parent=5 // pred_check_branch
        %80 = sbr.rel (%p78) target = $region16
      $region15: #{tpu_custom_call.1} parent=5 // pred_region
        // Predicated region
        $region17: #{tpu_custom_call.1} parent=15 // pred_check
          %p81 = pneg %p30
        $region18: #{tpu_custom_call.1} parent=15 // pred_check_branch
          %83 = sbr.rel (%p81) target = $region20
        $region19: #{tpu_custom_call.1} parent=15 // pred_region
          %s84 = smul.u32 16, %s10
          %p85 = scmp.lt.s32.totalorder %s84, 31
          %s86 = scalar_select %p85, %s84, 31
          %s87 = smul.addr %s86, 8
          %s88 = scalar_lea.vmem %s0, %s87
          %s89 = smul.u32 16, %s10
        $region20: #{tpu_custom_call.1} parent=15 // pred_fallthru
          _
      $region16: #{tpu_custom_call.1} parent=5 // pred_fallthru
        _
      %p90 = scmp.le.s32.totalorder 1, %s10
      %p91 = scmp.lt.s32.totalorder %s10, 3
      %p92 = pnand %p90, %p91
      %p93 = pneg %p92
      // Predicated region
      $region21: #{tpu_custom_call.1} parent=5 // pred_check
        _
      $region22: #{tpu_custom_call.1} parent=5 // pred_check_branch
        %95 = sbr.rel (%p92) target = $region24
      $region23: #{tpu_custom_call.1} parent=5 // pred_region
        %s96 = ssub.s32 %s10, 1
        %s97 = smul.u32 16, %s15
        %p98 = scmp.lt.s32.totalorder %s97, 31
        %s99 = scalar_select %p98, %s97, 31
        %s100 = smul.addr %s99, 8
        %s101 = scalar_lea.vmem %s0, %s100
        %p102 = pneg %p36
        %p103 = pneg %p33
        %p104 = pneg %p62
        %p105 = pneg %p59
        %s106 = sand.u32 %s49, 1
        %s107 = scalar_lea.sflag [#allocation4], %s106
        %s108 = sand.u32 %s49, 1
        %s109 = scalar_lea.vmem [#allocation3], %s108
        %s110 = smul.u32 16, %s15
        %p111 = scmp.lt.s32.totalorder %s110, 31
        %s112 = scalar_select %p111, %s110, 31
        %s113 = smul.addr %s112, 8
        %s114 = scalar_lea.vmem %s0, %s113
        %s115 = smul.u32 16, %s15
        %p116 = scmp.eq.s32.totalorder %s15, 0
        // Predicated region
        $region25: #{tpu_custom_call.1} parent=23 // pred_check
          %p117 = pneg %p116
        $region26: #{tpu_custom_call.1} parent=23 // pred_check_branch
          %119 = sbr.rel (%p117) target = $region28
        $region27: #{tpu_custom_call.1} parent=23 // pred_region
          %vm120 = vcmask 0
          %121 = vst.msk [vmem:[#allocation2] sm:$0x1] %vm120, 4294967295
        $region28: #{tpu_custom_call.1} parent=23 // pred_fallthru
          _
        %v122 = vlaneseq
        %v123 = vand.u32 %v122, 127
        %v124 = vlaneseq
        %v125 = vshrl.u32 %v124, 7
        %v126 = vadd.s32 %v125, 8
        %v127 = vadd.s32 %v125, 16
        %v128 = vadd.s32 %v125, 24
        %v129 = vadd.s32 %v125, 32
        %v130 = vadd.s32 %v125, 40
        %v131 = vadd.s32 %v125, 48
        %v132 = vadd.s32 %v125, 56
        %v133 = vadd.s32 %v125, 64
        %v134 = vadd.s32 %v125, 72
        %v135 = vadd.s32 %v125, 80
        %v136 = vadd.s32 %v125, 88
        %v137 = vadd.s32 %v125, 96
        %v138 = vadd.s32 %v125, 104
        %v139 = vadd.s32 %v125, 112
        %v140 = vadd.s32 %v125, 120
        %v141 = vld [vmem:[#allocation2] sm:$0x1]
        %v142 = vld [vmem:[%s114] sm:$0xff]
        %v143 = vld [vmem:[%s114 + $0x8] sm:$0xff]
        %v144 = vld [vmem:[%s114 + $0x10] sm:$0xff]
        %v145 = vld [vmem:[%s114 + $0x18] sm:$0xff]
        %v146 = vld [vmem:[%s114 + $0x20] sm:$0xff]
        %v147 = vld [vmem:[%s114 + $0x28] sm:$0xff]
        %v148 = vld [vmem:[%s114 + $0x30] sm:$0xff]
        %v149 = vld [vmem:[%s114 + $0x38] sm:$0xff]
        %v150 = vld [vmem:[%s114 + $0x40] sm:$0xff]
        %v151 = vld [vmem:[%s114 + $0x48] sm:$0xff]
        %v152 = vld [vmem:[%s114 + $0x50] sm:$0xff]
        %v153 = vld [vmem:[%s114 + $0x58] sm:$0xff]
        %v154 = vld [vmem:[%s114 + $0x60] sm:$0xff]
        %v155 = vld [vmem:[%s114 + $0x68] sm:$0xff]
        %v156 = vld [vmem:[%s114 + $0x70] sm:$0xff]
        %v157 = vld [vmem:[%s114 + $0x78] sm:$0xff]
        %vm158 = vcmask 261120
        %v159 = vsel %vm158, %v142, -inf
        %160 = vmax.xlane.f32.xlu0 %v159
        %v161 = vpop.xlane.xlu0 %160
        %v162 = vsel %vm158, %v143, -inf
        %163 = vmax.xlane.f32.xlu0 %v162
        %v164 = vpop.xlane.xlu0 %163
        %v165 = vsel %vm158, %v144, -inf
        %166 = vmax.xlane.f32.xlu0 %v165
        %v167 = vpop.xlane.xlu0 %166
        %v168 = vsel %vm158, %v145, -inf
        %169 = vmax.xlane.f32.xlu0 %v168
        %v170 = vpop.xlane.xlu0 %169
        %v171 = vsel %vm158, %v146, -inf
        %172 = vmax.xlane.f32.xlu0 %v171
        %v173 = vpop.xlane.xlu0 %172
        %v174 = vsel %vm158, %v147, -inf
        %175 = vmax.xlane.f32.xlu0 %v174
        %v176 = vpop.xlane.xlu0 %175
        %v177 = vsel %vm158, %v148, -inf
        %178 = vmax.xlane.f32.xlu0 %v177
        %v179 = vpop.xlane.xlu0 %178
        %v180 = vsel %vm158, %v149, -inf
        %181 = vmax.xlane.f32.xlu0 %v180
        %v182 = vpop.xlane.xlu0 %181
        %v183 = vsel %vm158, %v150, -inf
        %184 = vmax.xlane.f32.xlu0 %v183
        %v185 = vpop.xlane.xlu0 %184
        %v186 = vsel %vm158, %v151, -inf
        %187 = vmax.xlane.f32.xlu0 %v186
        %v188 = vpop.xlane.xlu0 %187
        %v189 = vsel %vm158, %v152, -inf
        %190 = vmax.xlane.f32.xlu0 %v189
        %v191 = vpop.xlane.xlu0 %190
        %v192 = vsel %vm158, %v153, -inf
        %193 = vmax.xlane.f32.xlu0 %v192
        %v194 = vpop.xlane.xlu0 %193
        %v195 = vsel %vm158, %v154, -inf
        %196 = vmax.xlane.f32.xlu0 %v195
        %v197 = vpop.xlane.xlu0 %196
        %v198 = vsel %vm158, %v155, -inf
        %199 = vmax.xlane.f32.xlu0 %v198
        %v200 = vpop.xlane.xlu0 %199
        %v201 = vsel %vm158, %v156, -inf
        %202 = vmax.xlane.f32.xlu0 %v201
        %v203 = vpop.xlane.xlu0 %202
        %v204 = vsel %vm158, %v157, -inf
        %205 = vmax.xlane.f32.xlu0 %v204
        %v206 = vpop.xlane.xlu0 %205
        %vm207 = vcmp.eq.f32.partialorder %v142, %v161
        %vm208 = vcmp.eq.f32.partialorder %v143, %v164
        %vm209 = vcmp.eq.f32.partialorder %v144, %v167
        %vm210 = vcmp.eq.f32.partialorder %v145, %v170
        %vm211 = vcmp.eq.f32.partialorder %v146, %v173
        %vm212 = vcmp.eq.f32.partialorder %v147, %v176
        %vm213 = vcmp.eq.f32.partialorder %v148, %v179
        %vm214 = vcmp.eq.f32.partialorder %v149, %v182
        %vm215 = vcmp.eq.f32.partialorder %v150, %v185
        %vm216 = vcmp.eq.f32.partialorder %v151, %v188
        %vm217 = vcmp.eq.f32.partialorder %v152, %v191
        %vm218 = vcmp.eq.f32.partialorder %v153, %v194
        %vm219 = vcmp.eq.f32.partialorder %v154, %v197
        %vm220 = vcmp.eq.f32.partialorder %v155, %v200
        %vm221 = vcmp.eq.f32.partialorder %v156, %v203
        %vm222 = vcmp.eq.f32.partialorder %v157, %v206
        %v223 = vsel %vm207, %v123, 32
        %v224 = vsel %vm208, %v123, 32
        %v225 = vsel %vm209, %v123, 32
        %v226 = vsel %vm210, %v123, 32
        %v227 = vsel %vm211, %v123, 32
        %v228 = vsel %vm212, %v123, 32
        %v229 = vsel %vm213, %v123, 32
        %v230 = vsel %vm214, %v123, 32
        %v231 = vsel %vm215, %v123, 32
        %v232 = vsel %vm216, %v123, 32
        %v233 = vsel %vm217, %v123, 32
        %v234 = vsel %vm218, %v123, 32
        %v235 = vsel %vm219, %v123, 32
        %v236 = vsel %vm220, %v123, 32
        %v237 = vsel %vm221, %v123, 32
        %v238 = vsel %vm222, %v123, 32
        %v239 = vsel %vm158, %v223, 2147483647
        %v240 = vand.u32 %v239, 65535
        %v241 = vshra.s32 %v239, 16
        %v242 = vcvt.s32.f32 %v240
        %v243 = vcvt.s32.f32 %v241
        %244 = vmin.xlane.f32.xlu0 %v243
        %v245 = vpop.xlane.xlu0 %244
        %vm246 = vcmp.eq.f32.partialorder %v243, %v245
        %v247 = vsel %vm246, %v242, inf
        %248 = vmin.xlane.f32.xlu0 %v247
        %v249 = vpop.xlane.xlu0 %248
        %v250 = vcvt.f32.s32 %v249
        %v251 = vcvt.f32.s32 %v245
        %v252 = vshll.u32 %v251, 16
        %v253 = vadd.s32 %v252, %v250
        %v254 = vsel %vm158, %v224, 2147483647
        %v255 = vand.u32 %v254, 65535
        %v256 = vshra.s32 %v254, 16
        %v257 = vcvt.s32.f32 %v255
        %v258 = vcvt.s32.f32 %v256
        %259 = vmin.xlane.f32.xlu0 %v258
        %v260 = vpop.xlane.xlu0 %259
        %vm261 = vcmp.eq.f32.partialorder %v258, %v260
        %v262 = vsel %vm261, %v257, inf
        %263 = vmin.xlane.f32.xlu0 %v262
        %v264 = vpop.xlane.xlu0 %263
        %v265 = vcvt.f32.s32 %v264
        %v266 = vcvt.f32.s32 %v260
        %v267 = vshll.u32 %v266, 16
        %v268 = vadd.s32 %v267, %v265
        %v269 = vsel %vm158, %v225, 2147483647
        %v270 = vand.u32 %v269, 65535
        %v271 = vshra.s32 %v269, 16
        %v272 = vcvt.s32.f32 %v270
        %v273 = vcvt.s32.f32 %v271
        %274 = vmin.xlane.f32.xlu0 %v273
        %v275 = vpop.xlane.xlu0 %274
        %vm276 = vcmp.eq.f32.partialorder %v273, %v275
        %v277 = vsel %vm276, %v272, inf
        %278 = vmin.xlane.f32.xlu0 %v277
        %v279 = vpop.xlane.xlu0 %278
        %v280 = vcvt.f32.s32 %v279
        %v281 = vcvt.f32.s32 %v275
        %v282 = vshll.u32 %v281, 16
        %v283 = vadd.s32 %v282, %v280
        %v284 = vsel %vm158, %v226, 2147483647
        %v285 = vand.u32 %v284, 65535
        %v286 = vshra.s32 %v284, 16
        %v287 = vcvt.s32.f32 %v285
        %v288 = vcvt.s32.f32 %v286
        %289 = vmin.xlane.f32.xlu0 %v288
        %v290 = vpop.xlane.xlu0 %289
        %vm291 = vcmp.eq.f32.partialorder %v288, %v290
        %v292 = vsel %vm291, %v287, inf
        %293 = vmin.xlane.f32.xlu0 %v292
        %v294 = vpop.xlane.xlu0 %293
        %v295 = vcvt.f32.s32 %v294
        %v296 = vcvt.f32.s32 %v290
        %v297 = vshll.u32 %v296, 16
        %v298 = vadd.s32 %v297, %v295
        %v299 = vsel %vm158, %v227, 2147483647
        %v300 = vand.u32 %v299, 65535
        %v301 = vshra.s32 %v299, 16
        %v302 = vcvt.s32.f32 %v300
        %v303 = vcvt.s32.f32 %v301
        %304 = vmin.xlane.f32.xlu0 %v303
        %v305 = vpop.xlane.xlu0 %304
        %vm306 = vcmp.eq.f32.partialorder %v303, %v305
        %v307 = vsel %vm306, %v302, inf
        %308 = vmin.xlane.f32.xlu0 %v307
        %v309 = vpop.xlane.xlu0 %308
        %v310 = vcvt.f32.s32 %v309
        %v311 = vcvt.f32.s32 %v305
        %v312 = vshll.u32 %v311, 16
        %v313 = vadd.s32 %v312, %v310
        %v314 = vsel %vm158, %v228, 2147483647
        %v315 = vand.u32 %v314, 65535
        %v316 = vshra.s32 %v314, 16
        %v317 = vcvt.s32.f32 %v315
        %v318 = vcvt.s32.f32 %v316
        %319 = vmin.xlane.f32.xlu0 %v318
        %v320 = vpop.xlane.xlu0 %319
        %vm321 = vcmp.eq.f32.partialorder %v318, %v320
        %v322 = vsel %vm321, %v317, inf
        %323 = vmin.xlane.f32.xlu0 %v322
        %v324 = vpop.xlane.xlu0 %323
        %v325 = vcvt.f32.s32 %v324
        %v326 = vcvt.f32.s32 %v320
        %v327 = vshll.u32 %v326, 16
        %v328 = vadd.s32 %v327, %v325
        %v329 = vsel %vm158, %v229, 2147483647
        %v330 = vand.u32 %v329, 65535
        %v331 = vshra.s32 %v329, 16
        %v332 = vcvt.s32.f32 %v330
        %v333 = vcvt.s32.f32 %v331
        %334 = vmin.xlane.f32.xlu0 %v333
        %v335 = vpop.xlane.xlu0 %334
        %vm336 = vcmp.eq.f32.partialorder %v333, %v335
        %v337 = vsel %vm336, %v332, inf
        %338 = vmin.xlane.f32.xlu0 %v337
        %v339 = vpop.xlane.xlu0 %338
        %v340 = vcvt.f32.s32 %v339
        %v341 = vcvt.f32.s32 %v335
        %v342 = vshll.u32 %v341, 16
        %v343 = vadd.s32 %v342, %v340
        %v344 = vsel %vm158, %v230, 2147483647
        %v345 = vand.u32 %v344, 65535
        %v346 = vshra.s32 %v344, 16
        %v347 = vcvt.s32.f32 %v345
        %v348 = vcvt.s32.f32 %v346
        %349 = vmin.xlane.f32.xlu0 %v348
        %v350 = vpop.xlane.xlu0 %349
        %vm351 = vcmp.eq.f32.partialorder %v348, %v350
        %v352 = vsel %vm351, %v347, inf
        %353 = vmin.xlane.f32.xlu0 %v352
        %v354 = vpop.xlane.xlu0 %353
        %v355 = vcvt.f32.s32 %v354
        %v356 = vcvt.f32.s32 %v350
        %v357 = vshll.u32 %v356, 16
        %v358 = vadd.s32 %v357, %v355
        %v359 = vsel %vm158, %v231, 2147483647
        %v360 = vand.u32 %v359, 65535
        %v361 = vshra.s32 %v359, 16
        %v362 = vcvt.s32.f32 %v360
        %v363 = vcvt.s32.f32 %v361
        %364 = vmin.xlane.f32.xlu0 %v363
        %v365 = vpop.xlane.xlu0 %364
        %vm366 = vcmp.eq.f32.partialorder %v363, %v365
        %v367 = vsel %vm366, %v362, inf
        %368 = vmin.xlane.f32.xlu0 %v367
        %v369 = vpop.xlane.xlu0 %368
        %v370 = vcvt.f32.s32 %v369
        %v371 = vcvt.f32.s32 %v365
        %v372 = vshll.u32 %v371, 16
        %v373 = vadd.s32 %v372, %v370
        %v374 = vsel %vm158, %v232, 2147483647
        %v375 = vand.u32 %v374, 65535
        %v376 = vshra.s32 %v374, 16
        %v377 = vcvt.s32.f32 %v375
        %v378 = vcvt.s32.f32 %v376
        %379 = vmin.xlane.f32.xlu0 %v378
        %v380 = vpop.xlane.xlu0 %379
        %vm381 = vcmp.eq.f32.partialorder %v378, %v380
        %v382 = vsel %vm381, %v377, inf
        %383 = vmin.xlane.f32.xlu0 %v382
        %v384 = vpop.xlane.xlu0 %383
        %v385 = vcvt.f32.s32 %v384
        %v386 = vcvt.f32.s32 %v380
        %v387 = vshll.u32 %v386, 16
        %v388 = vadd.s32 %v387, %v385
        %v389 = vsel %vm158, %v233, 2147483647
        %v390 = vand.u32 %v389, 65535
        %v391 = vshra.s32 %v389, 16
        %v392 = vcvt.s32.f32 %v390
        %v393 = vcvt.s32.f32 %v391
        %394 = vmin.xlane.f32.xlu0 %v393
        %v395 = vpop.xlane.xlu0 %394
        %vm396 = vcmp.eq.f32.partialorder %v393, %v395
        %v397 = vsel %vm396, %v392, inf
        %398 = vmin.xlane.f32.xlu0 %v397
        %v399 = vpop.xlane.xlu0 %398
        %v400 = vcvt.f32.s32 %v399
        %v401 = vcvt.f32.s32 %v395
        %v402 = vshll.u32 %v401, 16
        %v403 = vadd.s32 %v402, %v400
        %v404 = vsel %vm158, %v234, 2147483647
        %v405 = vand.u32 %v404, 65535
        %v406 = vshra.s32 %v404, 16
        %v407 = vcvt.s32.f32 %v405
        %v408 = vcvt.s32.f32 %v406
        %409 = vmin.xlane.f32.xlu0 %v408
        %v410 = vpop.xlane.xlu0 %409
        %vm411 = vcmp.eq.f32.partialorder %v408, %v410
        %v412 = vsel %vm411, %v407, inf
        %413 = vmin.xlane.f32.xlu0 %v412
        %v414 = vpop.xlane.xlu0 %413
        %v415 = vcvt.f32.s32 %v414
        %v416 = vcvt.f32.s32 %v410
        %v417 = vshll.u32 %v416, 16
        %v418 = vadd.s32 %v417, %v415
        %v419 = vsel %vm158, %v235, 2147483647
        %v420 = vand.u32 %v419, 65535
        %v421 = vshra.s32 %v419, 16
        %v422 = vcvt.s32.f32 %v420
        %v423 = vcvt.s32.f32 %v421
        %424 = vmin.xlane.f32.xlu0 %v423
        %v425 = vpop.xlane.xlu0 %424
        %vm426 = vcmp.eq.f32.partialorder %v423, %v425
        %v427 = vsel %vm426, %v422, inf
        %428 = vmin.xlane.f32.xlu0 %v427
        %v429 = vpop.xlane.xlu0 %428
        %v430 = vcvt.f32.s32 %v429
        %v431 = vcvt.f32.s32 %v425
        %v432 = vshll.u32 %v431, 16
        %v433 = vadd.s32 %v432, %v430
        %v434 = vsel %vm158, %v236, 2147483647
        %v435 = vand.u32 %v434, 65535
        %v436 = vshra.s32 %v434, 16
        %v437 = vcvt.s32.f32 %v435
        %v438 = vcvt.s32.f32 %v436
        %439 = vmin.xlane.f32.xlu0 %v438
        %v440 = vpop.xlane.xlu0 %439
        %vm441 = vcmp.eq.f32.partialorder %v438, %v440
        %v442 = vsel %vm441, %v437, inf
        %443 = vmin.xlane.f32.xlu0 %v442
        %v444 = vpop.xlane.xlu0 %443
        %v445 = vcvt.f32.s32 %v444
        %v446 = vcvt.f32.s32 %v440
        %v447 = vshll.u32 %v446, 16
        %v448 = vadd.s32 %v447, %v445
        %v449 = vsel %vm158, %v237, 2147483647
        %v450 = vand.u32 %v449, 65535
        %v451 = vshra.s32 %v449, 16
        %v452 = vcvt.s32.f32 %v450
        %v453 = vcvt.s32.f32 %v451
        %454 = vmin.xlane.f32.xlu0 %v453
        %v455 = vpop.xlane.xlu0 %454
        %vm456 = vcmp.eq.f32.partialorder %v453, %v455
        %v457 = vsel %vm456, %v452, inf
        %458 = vmin.xlane.f32.xlu0 %v457
        %v459 = vpop.xlane.xlu0 %458
        %v460 = vcvt.f32.s32 %v459
        %v461 = vcvt.f32.s32 %v455
        %v462 = vshll.u32 %v461, 16
        %v463 = vadd.s32 %v462, %v460
        %v464 = vsel %vm158, %v238, 2147483647
        %v465 = vand.u32 %v464, 65535
        %v466 = vshra.s32 %v464, 16
        %v467 = vcvt.s32.f32 %v465
        %v468 = vcvt.s32.f32 %v466
        %469 = vmin.xlane.f32.xlu0 %v468
        %v470 = vpop.xlane.xlu0 %469
        %vm471 = vcmp.eq.f32.partialorder %v468, %v470
        %v472 = vsel %vm471, %v467, inf
        %473 = vmin.xlane.f32.xlu0 %v472
        %v474 = vpop.xlane.xlu0 %473
        %v475 = vcvt.f32.s32 %v474
        %v476 = vcvt.f32.s32 %v470
        %v477 = vshll.u32 %v476, 16
        %v478 = vadd.s32 %v477, %v475
        %vm479 = vcmp.eq.s32.totalorder %v125, %v123
        %vm480 = vcmp.eq.s32.totalorder %v126, %v123
        %vm481 = vcmp.eq.s32.totalorder %v127, %v123
        %vm482 = vcmp.eq.s32.totalorder %v128, %v123
        %vm483 = vcmp.eq.s32.totalorder %v129, %v123
        %vm484 = vcmp.eq.s32.totalorder %v130, %v123
        %vm485 = vcmp.eq.s32.totalorder %v131, %v123
        %vm486 = vcmp.eq.s32.totalorder %v132, %v123
        %vm487 = vcmp.eq.s32.totalorder %v133, %v123
        %vm488 = vcmp.eq.s32.totalorder %v134, %v123
        %vm489 = vcmp.eq.s32.totalorder %v135, %v123
        %vm490 = vcmp.eq.s32.totalorder %v136, %v123
        %vm491 = vcmp.eq.s32.totalorder %v137, %v123
        %vm492 = vcmp.eq.s32.totalorder %v138, %v123
        %vm493 = vcmp.eq.s32.totalorder %v139, %v123
        %vm494 = vcmp.eq.s32.totalorder %v140, %v123
        %v495 = vsel %vm479, %v253, 4294967295
        %v496 = vsel %vm480, %v268, 4294967295
        %v497 = vsel %vm481, %v283, 4294967295
        %v498 = vsel %vm482, %v298, 4294967295
        %v499 = vsel %vm483, %v313, 4294967295
        %v500 = vsel %vm484, %v328, 4294967295
        %v501 = vsel %vm485, %v343, 4294967295
        %v502 = vsel %vm486, %v358, 4294967295
        %v503 = vsel %vm487, %v373, 4294967295
        %v504 = vsel %vm488, %v388, 4294967295
        %v505 = vsel %vm489, %v403, 4294967295
        %v506 = vsel %vm490, %v418, 4294967295
        %v507 = vsel %vm491, %v433, 4294967295
        %v508 = vsel %vm492, %v448, 4294967295
        %v509 = vsel %vm493, %v463, 4294967295
        %v510 = vsel %vm494, %v478, 4294967295
        %vm511 = vcmp.gt.s32.totalorder %v495, %v499
        %v512 = vsel %vm511, %v495, %v499
        %vm513 = vcmp.gt.s32.totalorder %v496, %v500
        %v514 = vsel %vm513, %v496, %v500
        %vm515 = vcmp.gt.s32.totalorder %v497, %v501
        %v516 = vsel %vm515, %v497, %v501
        %vm517 = vcmp.gt.s32.totalorder %v498, %v502
        %v518 = vsel %vm517, %v498, %v502
        %vm519 = vcmp.gt.s32.totalorder %v512, %v503
        %v520 = vsel %vm519, %v512, %v503
        %vm521 = vcmp.gt.s32.totalorder %v514, %v504
        %v522 = vsel %vm521, %v514, %v504
        %vm523 = vcmp.gt.s32.totalorder %v516, %v505
        %v524 = vsel %vm523, %v516, %v505
        %vm525 = vcmp.gt.s32.totalorder %v518, %v506
        %v526 = vsel %vm525, %v518, %v506
        %vm527 = vcmp.gt.s32.totalorder %v520, %v507
        %v528 = vsel %vm527, %v520, %v507
        %vm529 = vcmp.gt.s32.totalorder %v522, %v508
        %v530 = vsel %vm529, %v522, %v508
        %vm531 = vcmp.gt.s32.totalorder %v524, %v509
        %v532 = vsel %vm531, %v524, %v509
        %vm533 = vcmp.gt.s32.totalorder %v526, %v510
        %v534 = vsel %vm533, %v526, %v510
        %vm535 = vcmp.gt.s32.totalorder %v528, %v530
        %v536 = vsel %vm535, %v528, %v530
        %vm537 = vcmp.gt.s32.totalorder %v532, %v534
        %v538 = vsel %vm537, %v532, %v534
        %vm539 = vcmp.gt.s32.totalorder %v536, %v538
        %v540 = vsel %vm539, %v536, %v538
        %v541 = vrot.slane %v540, 4
        %vm542 = vcmp.gt.s32.totalorder %v540, %v541
        %v543 = vsel %vm542, %v540, %v541
        %v544 = vrot.slane %v543, 2
        %vm545 = vcmp.gt.s32.totalorder %v543, %v544
        %v546 = vsel %vm545, %v543, %v544
        %v547 = vrot.slane %v546, 1
        %vm548 = vcmp.gt.s32.totalorder %v546, %v547
        %v549 = vsel %vm548, %v546, %v547
        %550 = vrot.lane.b32.xlu0 %v549, 1
        %v551 = vpop.permute.xlu0 %550
        %vm552 = vcmp.eq.s32.totalorder %v123, 0
        %553 = vset.pattern.permute.xlu0 0
        %554 = vperm.xlu0 %553, %v141
        %v555 = vpop.permute.xlu0 %554
        %v556 = vperm.slane %v555, 0
        %v557 = vsel %vm552, %v556, %v551
        %vm558 = vcmp.ne.s32.totalorder %v549, 0
        %vm559 = vcmp.ne.s32.totalorder %v549, %v557
        %vm560 = vmand %vm558, %vm559
        %v561 = vsel %vm560, %v549, 4294967295
        %562 = vst [vmem:[%s109] sm:$0x1] %v561
        %vm563 = vcmp.eq.s32.totalorder %v123, 127
        %v564 = vsel %vm563, %v549, 4294967295
        %v565 = vand.u32 %v564, 65535
        %v566 = vshra.s32 %v564, 16
        %v567 = vcvt.s32.f32 %v565
        %v568 = vcvt.s32.f32 %v566
        %569 = vmax.xlane.f32.xlu0 %v568
        %v570 = vpop.xlane.xlu0 %569
        %vm571 = vcmp.eq.f32.partialorder %v568, %v570
        %v572 = vsel %vm571, %v567, -inf
        %573 = vmax.xlane.f32.xlu0 %v572
        %v574 = vpop.xlane.xlu0 %573
        %v575 = vcvt.f32.s32 %v574
        %v576 = vcvt.f32.s32 %v570
        %v577 = vshll.u32 %v576, 16
        %v578 = vadd.s32 %v577, %v575
        %vm579 = vcmask 0
        %580 = vst.msk [vmem:[#allocation2] sm:$0x1] %vm579, %v578
        %s581 = sand.u32 %s49, 1
        %s582 = scalar_lea.sflag [#allocation4], %s581
        %s583 = sand.u32 %s49, 1
        %s584 = scalar_lea.vmem [#allocation3], %s583
        // Predicated region
        $region29: #{tpu_custom_call.1} parent=23 // pred_check
          %p585 = pneg %p59
        $region30: #{tpu_custom_call.1} parent=23 // pred_check_branch
          %587 = sbr.rel (%p585) target = $region32
        $region31: #{tpu_custom_call.1} parent=23 // pred_region
          %589 = vsyncadd %s582, 0
          %s590 = scalar_lea.hbm %s1, %s15
          %s592 = sshll.u32 %s584, 4
          %s593 = int_to_ptr.vmem [resolvable:$true] %s592
          %s594 = sshll.u32 %s590, 4
          %s595 = int_to_ptr.hbm [resolvable:$true] %s594
          %597 = dma.vmem_to_hbm [thread:$0]  %s593, 16, %s595, %s582
        $region32: #{tpu_custom_call.1} parent=23 // pred_fallthru
          _
      $region24: #{tpu_custom_call.1} parent=5 // pred_fallthru
        _
      %p598 = scmp.le.s32.totalorder 2, %s10
      // Predicated region
      $region33: #{tpu_custom_call.1} parent=5 // pred_check
        %p599 = pneg %p598
      $region34: #{tpu_custom_call.1} parent=5 // pred_check_branch
        %601 = sbr.rel (%p599) target = $region36
      $region35: #{tpu_custom_call.1} parent=5 // pred_region
        %s602 = ssub.s32 %s10, 2
        // Predicated region
        $region37: #{tpu_custom_call.1} parent=35 // pred_check
          %p603 = pneg %p65
        $region38: #{tpu_custom_call.1} parent=35 // pred_check_branch
          %605 = sbr.rel (%p603) target = $region40
        $region39: #{tpu_custom_call.1} parent=35 // pred_region
          %s606 = sand.u32 %s50, 1
          %s607 = scalar_lea.sflag [#allocation4], %s606
          %s608 = sand.u32 %s50, 1
          %s609 = scalar_lea.vmem [#allocation3], %s608
          %611 = dma.done %s607, 16
        $region40: #{tpu_custom_call.1} parent=35 // pred_fallthru
          _
      $region36: #{tpu_custom_call.1} parent=5 // pred_fallthru
        _
    $region6: #{tpu_custom_call.1} parent=1 // loop_footer
      %s14 = sadd.s32 1, %s10
    $region7: #{tpu_custom_call.1} parent=1 // loop_footer_branch
      %9 = sbr.rel target = $region3
    $region8: #{tpu_custom_call.1} parent=1 // loop_exit
      _
    %612 = vsyncpa [#allocation4], 1
    %s613 = scalar_lea.sflag [#allocation4], 1
    %614 = vsyncpa %s613, 1

</llo_original>
